<compile_context>
chip_gen: v7x
topology: tpu7x:2x2x1
jax: 0.10.0
libtpu: 0.0.40
codegen_flags: <defaults>
</compile_context>

<pallas_src>
import functools

import jax
import jax.numpy as jnp
from jax.experimental import pallas as pl
from jax.experimental.pallas import tpu as pltpu
import numpy as np


def _round_up(x, m):
    return ((x + m - 1) // m) * m


def _mlp_kernel(x_ref, wgu_ref, wd_ref, o_ref, acc_ref):
    # x_ref:   (tm, H)      token tile
    # wgu_ref: (H, 2*ti)    interleaved [gate_tile | up_tile] weight block
    # wd_ref:  (ti, H)      down_proj weight block (in, out)
    # o_ref:   (tm, H)      output tile (resident across the I axis)
    # acc_ref: (tm, H) f32  down-proj accumulator scratch
    j = pl.program_id(1)

    @pl.when(j == 0)
    def _init():
        acc_ref[...] = jnp.zeros_like(acc_ref)

    ti = wd_ref.shape[0]                      # static
    x = x_ref[...]

    # One fused MXU pass computes both gate and up for this I-tile.
    gu = jnp.dot(x, wgu_ref[...], preferred_element_type=jnp.float32)
    gate = gu[:, :ti]                         # ti is a multiple of 128 -> free
    up = gu[:, ti:]

    # silu(gate) * up in f32 (VPU + EUP), then feed the MXU in the weight dtype.
    hidden = (gate * jax.nn.sigmoid(gate)) * up
    acc_ref[...] += jnp.dot(hidden.astype(wd_ref.dtype), wd_ref[...],
                            preferred_element_type=jnp.float32)

    @pl.when(j == pl.num_programs(1) - 1)
    def _finalize():
        o_ref[...] = acc_ref[...].astype(o_ref.dtype)


def llama_fast_mlp(x, w_gate, w_up, w_down, *, tm=256, ti=None,
                   compute_dtype=None):
    """Fused Llama MLP.

    x: [B, S, H]; w_gate/w_up: [H, I]; w_down: [I, H]  ->  [B, S, H]

    tm: token tile (rows).  256 is a good default on v6e/v7x; automatically
        shrunk when B*S is small (decode).
    ti: intermediate-dim tile (rounded to a multiple of 128 for lane-aligned
        gate/up slices).  Defaults to a size whose double-buffered weight
        tiles + x/out/acc tiles fit under a 64 MiB VMEM budget (v7x-safe).
    compute_dtype: e.g. jnp.bfloat16 to halve MXU/HBM cost; accumulation and
        the silu*up math stay in f32.  Output keeps the input dtype.
    """
    orig_dtype = x.dtype
    B, S, H = x.shape
    I = w_gate.shape[1]
    assert w_gate.shape == (H, I)
    assert w_up.shape == (H, I)
    assert w_down.shape == (I, H)

    if compute_dtype is not None:
        x = x.astype(compute_dtype)
        w_gate = w_gate.astype(compute_dtype)
        w_up = w_up.astype(compute_dtype)
        w_down = w_down.astype(compute_dtype)

    wbytes = w_gate.dtype.itemsize
    xbytes = x.dtype.itemsize
    obytes = jnp.dtype(orig_dtype).itemsize

    # --- token tiling (ragged M handled by zero padding) -------------------
    M = B * S
    tm = _round_up(max(8, min(int(tm), M)), 8)
    M_pad = _round_up(M, tm)

    # --- intermediate-dim tiling --------------------------------------------
    vmem_limit = 64 * 1024 * 1024          # v7x physical VMEM per TC
    if ti is None:
        # Fixed VMEM cost that does not depend on ti:
        fixed = (2 * tm * H * xbytes       # double-buffered x tile
                 + 2 * tm * H * obytes     # double-buffered output tile
                 + tm * H * 4)             # f32 accumulator scratch
        budget = max(vmem_limit - fixed - (8 << 20), 8 << 20)  # 8 MiB headroom
        # Double-buffered (H, 2*ti) + (ti, H) weight tiles = 6*H*ti*wbytes.
        ti = (budget // (6 * H * wbytes)) // 128 * 128
    ti = max(128, _round_up(int(ti), 128))
    ti = min(ti, _round_up(I, 128))
    I_pad = _round_up(I, ti)
    n_i = I_pad // ti

    # --- pad operands (zero pads contribute exactly zero) -------------------
    x2 = x.reshape(M, H)
    if M_pad != M:
        x2 = jnp.pad(x2, ((0, M_pad - M), (0, 0)))
    if I_pad != I:
        w_gate = jnp.pad(w_gate, ((0, 0), (0, I_pad - I)))
        w_up = jnp.pad(w_up, ((0, 0), (0, I_pad - I)))
        w_down = jnp.pad(w_down, ((0, I_pad - I), (0, 0)))

    # Interleave gate/up per I-tile: columns [j*2ti, j*2ti+ti) = gate tile j,
    # columns [j*2ti+ti, (j+1)*2ti) = up tile j.  One-time layout transform.
    wgu = jnp.concatenate(
        [w_gate.reshape(H, n_i, ti), w_up.reshape(H, n_i, ti)], axis=2
    ).reshape(H, 2 * I_pad)

    grid = (M_pad // tm, n_i)

    cost = pl.CostEstimate(
        flops=6 * M_pad * H * I_pad,          # gate + up + down matmuls
        transcendentals=M_pad * I_pad,        # sigmoid in silu
        bytes_accessed=(M_pad * H * xbytes            # x
                        + 3 * H * I_pad * wbytes      # weights
                        + M_pad * H * obytes),        # out
    )

    out2 = pl.pallas_call(
        _mlp_kernel,
        out_shape=jax.ShapeDtypeStruct((M_pad, H), orig_dtype),
        grid_spec=pltpu.PrefetchScalarGridSpec(
            num_scalar_prefetch=0,
            grid=grid,
            in_specs=[
                pl.BlockSpec((tm, H), lambda i, j: (i, 0)),       # x tile
                pl.BlockSpec((H, 2 * ti), lambda i, j: (0, j)),   # gate|up tile
                pl.BlockSpec((ti, H), lambda i, j: (j, 0)),       # down tile
            ],
            out_specs=pl.BlockSpec((tm, H), lambda i, j: (i, 0)),
            scratch_shapes=[pltpu.VMEM((tm, H), jnp.float32)],
        ),
        compiler_params=pltpu.CompilerParams(
            dimension_semantics=("parallel", "arbitrary"),
            vmem_limit_bytes=vmem_limit,
        ),
        cost_estimate=cost,
    )(x2, wgu, w_down)

    return out2[:M].reshape(B, S, H)


def reference_mlp(x, w_gate, w_up, w_down):
    g = jnp.einsum("bsh,hi->bsi", x, w_gate)
    u = jnp.einsum("bsh,hi->bsi", x, w_up)
    h = g * jax.nn.sigmoid(g) * u
    return jnp.einsum("bsi,ih->bsh", h, w_down)


if __name__ == "__main__":
    key = jax.random.PRNGKey(0)

    # ---- test 1: small, module-consistent shapes, f32 path -----------------
    B, S, H, I = 2, 8, 32, 64
    kx, kg, ku, kd = jax.random.split(key, 4)
    x = jax.random.normal(kx, (B, S, H), dtype=jnp.float32)
    w_gate = jax.random.normal(kg, (H, I), dtype=jnp.float32) * (1.0 / np.sqrt(H))
    w_up = jax.random.normal(ku, (H, I), dtype=jnp.float32) * (1.0 / np.sqrt(H))
    w_down = jax.random.normal(kd, (I, H), dtype=jnp.float32) * (1.0 / np.sqrt(I))

    out = jax.block_until_ready(llama_fast_mlp(x, w_gate, w_up, w_down))
    ref = reference_mlp(x, w_gate, w_up, w_down)
    np.testing.assert_allclose(np.asarray(out), np.asarray(ref),
                               rtol=2e-5, atol=2e-5)

    # ---- test 2: ragged M + multi-tile I (exercises padding + accumulator) -
    B2, S2, H2, I2 = 1, 5, 32, 320
    kx2, kg2, ku2, kd2 = jax.random.split(jax.random.PRNGKey(1), 4)
    x2 = jax.random.normal(kx2, (B2, S2, H2), dtype=jnp.float32)
    wg2 = jax.random.normal(kg2, (H2, I2), dtype=jnp.float32) * (1.0 / np.sqrt(H2))
    wu2 = jax.random.normal(ku2, (H2, I2), dtype=jnp.float32) * (1.0 / np.sqrt(H2))
    wd2 = jax.random.normal(kd2, (I2, H2), dtype=jnp.float32) * (1.0 / np.sqrt(I2))

    out2 = jax.block_until_ready(llama_fast_mlp(x2, wg2, wu2, wd2, ti=128))
    ref2 = reference_mlp(x2, wg2, wu2, wd2)
    np.testing.assert_allclose(np.asarray(out2), np.asarray(ref2),
                               rtol=2e-5, atol=2e-5)

    # ---- test 3: bf16 compute path (f32 accumulation), looser tolerance ----
    out_bf16 = jax.block_until_ready(
        llama_fast_mlp(x, w_gate, w_up, w_down, compute_dtype=jnp.bfloat16))
    np.testing.assert_allclose(np.asarray(out_bf16), np.asarray(ref),
                               rtol=5e-2, atol=5e-2)

    print("KERNEL_OK")
</pallas_src>

<mosaic_0001>
module attributes {stable_mosaic.version = 11 : i64} {
  func.func @_mlp_kernel(%arg0: i32, %arg1: i32, %arg2: memref<16x32xf32, #tpu.memory_space<vmem>>, %arg3: memref<32x256xf32, #tpu.memory_space<vmem>>, %arg4: memref<128x32xf32, #tpu.memory_space<vmem>>, %arg5: memref<16x32xf32, #tpu.memory_space<vmem>>, %arg6: memref<16x32xf32, #tpu.memory_space<vmem>>) attributes {dimension_semantics = [#tpu.dimension_semantics<parallel>, #tpu.dimension_semantics<arbitrary>], iteration_bounds = array<i64: 1, 1>, scalar_prefetch = 0 : i64, scratch_operands = 1 : i64, tpu.core_type = #tpu.core_type<tc>, window_params = [{transform_indices = @transform_0, window_bounds = array<i64: 16, 32>}, {transform_indices = @transform_1, window_bounds = array<i64: 32, 256>}, {transform_indices = @transform_2, window_bounds = array<i64: 128, 32>}, {transform_indices = @transform_3, window_bounds = array<i64: 16, 32>}]} {
    %c0_i32 = arith.constant 0 : i32
    %0 = arith.cmpi eq, %arg1, %c0_i32 : i32
    %1 = arith.extui %0 : i1 to i32
    %c0_i32_0 = arith.constant 0 : i32
    %2 = arith.cmpi ne, %1, %c0_i32_0 : i32
    scf.if %2 {
      %cst_14 = arith.constant 0.000000e+00 : f32
      %23 = vector.broadcast %cst_14 : f32 to vector<16x32xf32>
      %c0_15 = arith.constant 0 : index
      %c0_16 = arith.constant 0 : index
      %24 = vector.load %arg6[%c0_15, %c0_16] : memref<16x32xf32, #tpu.memory_space<vmem>>, vector<16x32xf32>
      tpu.vector_store %arg6[%c0_15, %c0_16], %23 {strides = array<i32>} : memref<16x32xf32, #tpu.memory_space<vmem>>, vector<16x32xf32>,
    } else {
    }
    %c0 = arith.constant 0 : index
    %c0_1 = arith.constant 0 : index
    %3 = vector.load %arg2[%c0, %c0_1] : memref<16x32xf32, #tpu.memory_space<vmem>>, vector<16x32xf32>
    %c0_2 = arith.constant 0 : index
    %c0_3 = arith.constant 0 : index
    %4 = vector.load %arg3[%c0_2, %c0_3] : memref<32x256xf32, #tpu.memory_space<vmem>>, vector<32x256xf32>
    %cst = arith.constant dense<0.000000e+00> : vector<16x256xf32>
    %5 = tpu.matmul %3, %4, %cst {dimension_numbers = #tpu.dot_dimension_numbers<[1], [0], [0], [1], [0, 0, 1, 1], [], []>} : vector<16x32xf32>, vector<32x256xf32>, vector<16x256xf32> -> vector<16x256xf32>
    %6 = vector.extract_strided_slice %5 {offsets = [0, 0], sizes = [16, 128], strides = [1, 1]} : vector<16x256xf32> to vector<16x128xf32>
    %7 = vector.extract_strided_slice %5 {offsets = [0, 128], sizes = [16, 128], strides = [1, 1]} : vector<16x256xf32> to vector<16x128xf32>
    %8 = arith.negf %6 : vector<16x128xf32>
    %9 = math.exp %8 : vector<16x128xf32>
    %cst_4 = arith.constant 1.000000e+00 : f32
    %10 = vector.broadcast %cst_4 : f32 to vector<16x128xf32>
    %11 = arith.addf %10, %9 : vector<16x128xf32>
    %12 = arith.divf %10, %11 : vector<16x128xf32>
    %13 = arith.mulf %6, %12 : vector<16x128xf32>
    %14 = arith.mulf %13, %7 : vector<16x128xf32>
    %c0_5 = arith.constant 0 : index
    %c0_6 = arith.constant 0 : index
    %15 = vector.load %arg6[%c0_5, %c0_6] : memref<16x32xf32, #tpu.memory_space<vmem>>, vector<16x32xf32>
    %c0_7 = arith.constant 0 : index
    %c0_8 = arith.constant 0 : index
    %16 = vector.load %arg4[%c0_7, %c0_8] : memref<128x32xf32, #tpu.memory_space<vmem>>, vector<128x32xf32>
    %cst_9 = arith.constant dense<0.000000e+00> : vector<16x32xf32>
    %17 = tpu.matmul %14, %16, %cst_9 {dimension_numbers = #tpu.dot_dimension_numbers<[1], [0], [0], [1], [0, 0, 1, 1], [], []>} : vector<16x128xf32>, vector<128x32xf32>, vector<16x32xf32> -> vector<16x32xf32>
    %18 = arith.addf %15, %17 : vector<16x32xf32>
    %c0_10 = arith.constant 0 : index
    %c0_11 = arith.constant 0 : index
    %19 = vector.load %arg6[%c0_10, %c0_11] : memref<16x32xf32, #tpu.memory_space<vmem>>, vector<16x32xf32>
    tpu.vector_store %arg6[%c0_10, %c0_11], %18 {strides = array<i32>} : memref<16x32xf32, #tpu.memory_space<vmem>>, vector<16x32xf32>,
    %c0_i32_12 = arith.constant 0 : i32
    %20 = arith.cmpi eq, %arg1, %c0_i32_12 : i32
    %21 = arith.extui %20 : i1 to i32
    %c0_i32_13 = arith.constant 0 : i32
    %22 = arith.cmpi ne, %21, %c0_i32_13 : i32
    scf.if %22 {
      %c0_14 = arith.constant 0 : index
      %c0_15 = arith.constant 0 : index
      %23 = vector.load %arg6[%c0_14, %c0_15] : memref<16x32xf32, #tpu.memory_space<vmem>>, vector<16x32xf32>
      %c0_16 = arith.constant 0 : index
      %c0_17 = arith.constant 0 : index
      %24 = vector.load %arg5[%c0_16, %c0_17] : memref<16x32xf32, #tpu.memory_space<vmem>>, vector<16x32xf32>
      tpu.vector_store %arg5[%c0_16, %c0_17], %23 {strides = array<i32>} : memref<16x32xf32, #tpu.memory_space<vmem>>, vector<16x32xf32>,
    } else {
    }
    return
  }
  func.func @transform_0(%arg0: i32, %arg1: i32) -> (i32, i32) {
    %c0_i32 = arith.constant 0 : i32
    %c0_i32_0 = arith.constant 0 : i32
    return %arg0, %c0_i32 : i32, i32
  }
  func.func @transform_1(%arg0: i32, %arg1: i32) -> (i32, i32) {
    %c0_i32 = arith.constant 0 : i32
    %c0_i32_0 = arith.constant 0 : i32
    return %c0_i32, %arg1 : i32, i32
  }
  func.func @transform_2(%arg0: i32, %arg1: i32) -> (i32, i32) {
    %c0_i32 = arith.constant 0 : i32
    %c0_i32_0 = arith.constant 0 : i32
    return %arg1, %c0_i32 : i32, i32
  }
  func.func @transform_3(%arg0: i32, %arg1: i32) -> (i32, i32) {
    %c0_i32 = arith.constant 0 : i32
    %c0_i32_0 = arith.constant 0 : i32
    return %arg0, %c0_i32 : i32, i32
  }
}

</mosaic_0001>

<llo_original>
// kernel: tpu_custom_call.1
$region0: #{tpu_custom_call.1}
  #allocation0 [shape = 'u32[]', space=smem, size = 0x4, offset = 0x4, fixed_abs, tag = 'smem constant byte address 0x4 - core index']
  #allocation1 [shape = 'u32[144,128]{1,0:T(1,128)}', space=vmem, size = 0x12000, scoped, tag = 'internal scratch']
  #allocation2 [shape = 'f32[16,32]{1,0:T(8,128)}', space=vmem, size = 0x2000, scoped, tag = 'scratch operand']
  %s0 = inlined_call_operand.hbm [shape: f32[16,32], index: 0, kind: input, shape index: {}]
  %s1 = inlined_call_operand.hbm [shape: f32[32,256], index: 1, kind: input, shape index: {}]
  %s2 = inlined_call_operand.hbm [shape: f32[128,32], index: 2, kind: input, shape index: {}]
  %s3 = inlined_call_operand.hbm [shape: f32[16,32], index: 3, kind: output, shape index: {}]
  %s4 = sld [smem:[#allocation0]]
  $region42: #{tpu_custom_call.1} parent=0
    _
  %s6 = ssub.s32 1, %s4
  %s7 = scalar_select 0, %s6, %s4
  $region1: #{tpu_custom_call.1} parent=0
    #allocation3 [shape = 'u8[8192]{0}', space=vmem, size = 0x2000, scoped, tag = 'input window, operand 0, single buffered']
    #allocation4 [shape = 's32[1]{0}', space=sflag, size = 0x4, scoped, tag = 'scoped memory for tpu_custom_call.1']
    #allocation5 [shape = 's32[1]{0}', space=sflag, size = 0x4, scoped, tag = 'scoped memory for tpu_custom_call.1']
    #allocation6 [shape = 'u8[32768]{0}', space=vmem, size = 0x8000, scoped, tag = 'input window, operand 1, single buffered']
    #allocation7 [shape = 's32[1]{0}', space=sflag, size = 0x4, scoped, tag = 'scoped memory for tpu_custom_call.1']
    #allocation8 [shape = 'u8[65536]{0}', space=vmem, size = 0x10000, scoped, tag = 'input window, operand 2, single buffered']
    #allocation9 [shape = 'u8[8192]{0}', space=vmem, size = 0x2000, scoped, tag = 'output window, operand 0, single buffered']
    %8 = vsyncpa [#allocation4], 0
    %9 = vsyncpa [#allocation7], 0
    %10 = vsyncpa [#allocation5], 0
    // Predicated region
    $region2: #{tpu_custom_call.1} parent=1 // pred_check
      _
    $region3: #{tpu_custom_call.1} parent=1 // pred_check_branch
      %12 = sbr.rel (0) target = $region5
    $region4: #{tpu_custom_call.1} parent=1 // pred_region
      %s14 = ssub.s32 256, 256
      %15 = vsyncadd [#allocation4], %s14
      %s16 = sshll.u32 [#allocation3], 4
      %s17 = int_to_ptr.vmem [resolvable:$true] %s16
      %22 = dma.hbm_to_vmem [thread:$0]  %s0, 256, %s17, [#allocation4], 128, 128, 8
    $region5: #{tpu_custom_call.1} parent=1 // pred_fallthru
      _
    // Predicated region
    $region6: #{tpu_custom_call.1} parent=1 // pred_check
      _
    $region7: #{tpu_custom_call.1} parent=1 // pred_check_branch
      %24 = sbr.rel (0) target = $region9
    $region8: #{tpu_custom_call.1} parent=1 // pred_region
      %s26 = ssub.s32 1024, 1024
      %27 = vsyncadd [#allocation7], %s26
      %s28 = sshll.u32 [#allocation6], 4
      %s29 = int_to_ptr.vmem [resolvable:$true] %s28
      %34 = dma.hbm_to_vmem [thread:$0]  %s1, 1024, %s29, [#allocation7], 256, 256, 16
    $region9: #{tpu_custom_call.1} parent=1 // pred_fallthru
      _
    // Predicated region
    $region10: #{tpu_custom_call.1} parent=1 // pred_check
      _
    $region11: #{tpu_custom_call.1} parent=1 // pred_check_branch
      %36 = sbr.rel (0) target = $region13
    $region12: #{tpu_custom_call.1} parent=1 // pred_region
      %s38 = ssub.s32 2048, 2048
      %39 = vsyncadd [#allocation7], %s38
      %s40 = sshll.u32 [#allocation8], 4
      %s41 = int_to_ptr.vmem [resolvable:$true] %s40
      %46 = dma.hbm_to_vmem [thread:$0]  %s2, 2048, %s41, [#allocation7], 128, 128, 8
    $region13: #{tpu_custom_call.1} parent=1 // pred_fallthru
      _
    // Predicated region
    $region14: #{tpu_custom_call.1} parent=1 // pred_check
      _
    $region15: #{tpu_custom_call.1} parent=1 // pred_check_branch
      %48 = sbr.rel (0) target = $region17
    $region16: #{tpu_custom_call.1} parent=1 // pred_region
      %49 = dma.done [#allocation4], 256
    $region17: #{tpu_custom_call.1} parent=1 // pred_fallthru
      _
    // Predicated region
    $region18: #{tpu_custom_call.1} parent=1 // pred_check
      _
    $region19: #{tpu_custom_call.1} parent=1 // pred_check_branch
      %51 = sbr.rel (0) target = $region21
    $region20: #{tpu_custom_call.1} parent=1 // pred_region
      %52 = dma.done [#allocation7], 1024
    $region21: #{tpu_custom_call.1} parent=1 // pred_fallthru
      _
    // Predicated region
    $region22: #{tpu_custom_call.1} parent=1 // pred_check
      _
    $region23: #{tpu_custom_call.1} parent=1 // pred_check_branch
      %54 = sbr.rel (0) target = $region25
    $region24: #{tpu_custom_call.1} parent=1 // pred_region
      %55 = dma.done [#allocation7], 2048
    $region25: #{tpu_custom_call.1} parent=1 // pred_fallthru
      _
    %p56 = scmp.eq.s32.totalorder 0, 0
    // Predicated region
    $region26: #{tpu_custom_call.1} parent=1 // pred_check
      %p57 = pneg %p56
    $region27: #{tpu_custom_call.1} parent=1 // pred_check_branch
      %59 = sbr.rel (%p57) target = $region29
    $region28: #{tpu_custom_call.1} parent=1 // pred_region
      %vm60 = vcmask 261120
      %61 = vst.msk [vmem:[#allocation2] sm:$0xff] %vm60, 0.0
      %62 = vst.msk [vmem:[#allocation2 + $0x8] sm:$0xff] %vm60, 0.0
    $region29: #{tpu_custom_call.1} parent=1 // pred_fallthru
      _
    %v63 = vld [vmem:[#allocation3] sm:$0xff]
    %v64 = vld [vmem:[#allocation3 + $0x8] sm:$0xff]
    %v65 = vld [vmem:[#allocation6] sm:$0xff]
    %v66 = vld [vmem:[#allocation6 + $0x8] sm:$0xff]
    %v67 = vld [vmem:[#allocation6 + $0x10] sm:$0xff]
    %v68 = vld [vmem:[#allocation6 + $0x18] sm:$0xff]
    %v69 = vld [vmem:[#allocation6 + $0x20] sm:$0xff]
    %v70 = vld [vmem:[#allocation6 + $0x28] sm:$0xff]
    %v71 = vld [vmem:[#allocation6 + $0x30] sm:$0xff]
    %v72 = vld [vmem:[#allocation6 + $0x38] sm:$0xff]
    %vm73 = vcmask 261120
    %v75 = vsel %vm73, %v63, 0
    %v78 = vsel %vm73, %v64, 0
    %80 = vmatprep.subr.mxu0 %v66
    %81 = vmatpush1.msra.mxu0 %v65
    %82 = vmatprep.subr.mxu0 %v68
    %83 = vmatpush1.msra.mxu0 %v67
    %84 = vmatprep.subr.mxu0 %v70
    %85 = vmatpush1.msra.mxu0 %v69
    %86 = vmatprep.subr.mxu0 %v72
    %87 = vmatpush1.msra.mxu0 %v71
    %88 = vmatprep.subr.mxu0 0.0
    %89 = vmatpush1.msra.mxu0 0.0
    %90 = vmatprep.subr.mxu0 0.0
    %91 = vmatpush1.msra.mxu0 0.0
    %92 = vmatprep.subr.mxu0 0.0
    %93 = vmatpush1.msra.mxu0 0.0
    %94 = vmatprep.subr.mxu0 0.0
    %95 = vmatpush1.msra.mxu0 0.0
    %96 = vmatprep.subr.mxu0 0.0
    %97 = vmatpush1.msra.mxu0 0.0
    %98 = vmatprep.subr.mxu0 0.0
    %99 = vmatpush1.msra.mxu0 0.0
    %100 = vmatprep.subr.mxu0 0.0
    %101 = vmatpush1.msra.mxu0 0.0
    %102 = vmatprep.subr.mxu0 0.0
    %103 = vmatpush1.msra.mxu0 0.0
    %104 = vmatprep.subr.mxu0 0.0
    %105 = vmatpush1.msra.mxu0 0.0
    %106 = vmatprep.subr.mxu0 0.0
    %107 = vmatpush1.msra.mxu0 0.0
    %108 = vmatprep.subr.mxu0 0.0
    %109 = vmatpush1.msra.mxu0 0.0
    %110 = vmatprep.subr.mxu0 0.0
    %111 = vmatpush1.msra.mxu0 0.0
    %112 = vmatprep.subr.mxu0 0.0
    %113 = vmatpush1.msra.mxu0 0.0
    %114 = vmatprep.subr.mxu0 0.0
    %115 = vmatpush1.msra.mxu0 0.0
    %116 = vmatprep.subr.mxu0 0.0
    %117 = vmatpush1.msra.mxu0 0.0
    %118 = vmatprep.subr.mxu0 0.0
    %119 = vmatpush1.msra.mxu0 0.0
    %120 = vmatprep.subr.mxu0 0.0
    %121 = vmatpush1.msra.mxu0 0.0
    %122 = vmatprep.subr.mxu0 0.0
    %123 = vmatpush1.msra.mxu0 0.0
    %124 = vmatprep.subr.mxu0 0.0
    %125 = vmatpush1.msra.mxu0 0.0
    %126 = vmatprep.subr.mxu0 0.0
    %127 = vmatpush1.msra.mxu0 0.0
    %128 = vmatprep.subr.mxu0 0.0
    %129 = vmatpush1.msra.mxu0 0.0
    %130 = vmatprep.subr.mxu0 0.0
    %131 = vmatpush1.msra.mxu0 0.0
    %132 = vmatprep.subr.mxu0 0.0
    %133 = vmatpush1.msra.mxu0 0.0
    %134 = vmatprep.subr.mxu0 0.0
    %135 = vmatpush1.msra.mxu0 0.0
    %136 = vmatprep.subr.mxu0 0.0
    %137 = vmatpush1.msra.mxu0 0.0
    %138 = vmatprep.subr.mxu0 0.0
    %139 = vmatpush1.msra.mxu0 0.0
    %140 = vmatprep.subr.mxu0 0.0
    %141 = vmatpush1.msra.mxu0 0.0
    %142 = vmatprep.subr.mxu0 0.0
    %143 = vmatpush1.msra.mxu0 0.0
    %144 = vmatprep.mubr.f32.mxu0 0.0
    %145 = vmatmul.mubr.f32.gmra.mrb[0].mxu0 %v75
    %v146 = vpop.f32.mrb[0].mxu0
    %v147 = vadd.f32 0.0, %v146
    %v148 = vpop.f32.mrb[0].mxu0
    %v149 = vadd.f32 0.0, %v148
    %150 = vmatprep.mubr.f32.mxu0 0.0
    %151 = vmatmul.mubr.f32.gmra.mrb[0].mxu0 %v78
    %v152 = vpop.f32.mrb[0].mxu0
    %v153 = vadd.f32 0.0, %v152
    %v154 = vpop.f32.mrb[0].mxu0
    %v155 = vadd.f32 0.0, %v154
    %156 = vdwg.mxu0
    %v157 = vxor.u32 %v147, 2147483648
    %v158 = vxor.u32 %v153, 2147483648
    %v159 = vmul.f32 %v157, 1.442695
    %v160 = vpow.pop %v159
    %v161 = vmul.f32 %v158, 1.442695
    %v162 = vpow.pop %v161
    %v163 = vadd.f32 %v160, 1.0
    %v164 = vadd.f32 %v162, 1.0
    %v165 = vrcp.pop %v163
    %v166 = vmul.f32 1.0, %v165
    %v167 = vrcp.pop %v164
    %v168 = vmul.f32 1.0, %v167
    %v169 = vmul.f32 %v147, %v166
    %v170 = vmul.f32 %v153, %v168
    %v171 = vmul.f32 %v169, %v149
    %v172 = vmul.f32 %v170, %v155
    %v173 = vld [vmem:[#allocation2] sm:$0xff]
    %v174 = vld [vmem:[#allocation2 + $0x8] sm:$0xff]
    %v175 = vld [vmem:[#allocation8] sm:$0xff]
    %v176 = vld [vmem:[#allocation8 + $0x8] sm:$0xff]
    %v177 = vld [vmem:[#allocation8 + $0x10] sm:$0xff]
    %v178 = vld [vmem:[#allocation8 + $0x18] sm:$0xff]
    %v179 = vld [vmem:[#allocation8 + $0x20] sm:$0xff]
    %v180 = vld [vmem:[#allocation8 + $0x28] sm:$0xff]
    %v181 = vld [vmem:[#allocation8 + $0x30] sm:$0xff]
    %v182 = vld [vmem:[#allocation8 + $0x38] sm:$0xff]
    %v183 = vld [vmem:[#allocation8 + $0x40] sm:$0xff]
    %v184 = vld [vmem:[#allocation8 + $0x48] sm:$0xff]
    %v185 = vld [vmem:[#allocation8 + $0x50] sm:$0xff]
    %v186 = vld [vmem:[#allocation8 + $0x58] sm:$0xff]
    %v187 = vld [vmem:[#allocation8 + $0x60] sm:$0xff]
    %v188 = vld [vmem:[#allocation8 + $0x68] sm:$0xff]
    %v189 = vld [vmem:[#allocation8 + $0x70] sm:$0xff]
    %v190 = vld [vmem:[#allocation8 + $0x78] sm:$0xff]
    %191 = vmatprep.subr.mxu0 0.0
    %192 = vmatpush1.msra.mxu0 %v175
    %193 = vmatprep.subr.mxu0 0.0
    %194 = vmatpush1.msra.mxu0 %v176
    %195 = vmatprep.subr.mxu0 0.0
    %196 = vmatpush1.msra.mxu0 %v177
    %197 = vmatprep.subr.mxu0 0.0
    %198 = vmatpush1.msra.mxu0 %v178
    %199 = vmatprep.subr.mxu0 0.0
    %200 = vmatpush1.msra.mxu0 %v179
    %201 = vmatprep.subr.mxu0 0.0
    %202 = vmatpush1.msra.mxu0 %v180
    %203 = vmatprep.subr.mxu0 0.0
    %204 = vmatpush1.msra.mxu0 %v181
    %205 = vmatprep.subr.mxu0 0.0
    %206 = vmatpush1.msra.mxu0 %v182
    %207 = vmatprep.subr.mxu0 0.0
    %208 = vmatpush1.msra.mxu0 %v183
    %209 = vmatprep.subr.mxu0 0.0
    %210 = vmatpush1.msra.mxu0 %v184
    %211 = vmatprep.subr.mxu0 0.0
    %212 = vmatpush1.msra.mxu0 %v185
    %213 = vmatprep.subr.mxu0 0.0
    %214 = vmatpush1.msra.mxu0 %v186
    %215 = vmatprep.subr.mxu0 0.0
    %216 = vmatpush1.msra.mxu0 %v187
    %217 = vmatprep.subr.mxu0 0.0
    %218 = vmatpush1.msra.mxu0 %v188
    %219 = vmatprep.subr.mxu0 0.0
    %220 = vmatpush1.msra.mxu0 %v189
    %221 = vmatprep.subr.mxu0 0.0
    %222 = vmatpush1.msra.mxu0 %v190
    %223 = vmatprep.subr.mxu0 0.0
    %224 = vmatpush1.msra.mxu0 0.0
    %225 = vmatprep.subr.mxu0 0.0
    %226 = vmatpush1.msra.mxu0 0.0
    %227 = vmatprep.subr.mxu0 0.0
    %228 = vmatpush1.msra.mxu0 0.0
    %229 = vmatprep.subr.mxu0 0.0
    %230 = vmatpush1.msra.mxu0 0.0
    %231 = vmatprep.subr.mxu0 0.0
    %232 = vmatpush1.msra.mxu0 0.0
    %233 = vmatprep.subr.mxu0 0.0
    %234 = vmatpush1.msra.mxu0 0.0
    %235 = vmatprep.subr.mxu0 0.0
    %236 = vmatpush1.msra.mxu0 0.0
    %237 = vmatprep.subr.mxu0 0.0
    %238 = vmatpush1.msra.mxu0 0.0
    %239 = vmatprep.subr.mxu0 0.0
    %240 = vmatpush1.msra.mxu0 0.0
    %241 = vmatprep.subr.mxu0 0.0
    %242 = vmatpush1.msra.mxu0 0.0
    %243 = vmatprep.subr.mxu0 0.0
    %244 = vmatpush1.msra.mxu0 0.0
    %245 = vmatprep.subr.mxu0 0.0
    %246 = vmatpush1.msra.mxu0 0.0
    %247 = vmatprep.subr.mxu0 0.0
    %248 = vmatpush1.msra.mxu0 0.0
    %249 = vmatprep.subr.mxu0 0.0
    %250 = vmatpush1.msra.mxu0 0.0
    %251 = vmatprep.subr.mxu0 0.0
    %252 = vmatpush1.msra.mxu0 0.0
    %253 = vmatprep.subr.mxu0 0.0
    %254 = vmatpush1.msra.mxu0 0.0
    %255 = vmatprep.mubr.f32.mxu0 0.0
    %256 = vmatmul.mubr.f32.gmra.mrb[0].mxu0 %v171
    %v257 = vpop.f32.mrb[0].mxu0
    %v258 = vadd.f32 0.0, %v257
    %v259 = vpop.f32.mrb[0].mxu0
    %260 = vmatprep.mubr.f32.mxu0 0.0
    %261 = vmatmul.mubr.f32.gmra.mrb[0].mxu0 %v172
    %v262 = vpop.f32.mrb[0].mxu0
    %v263 = vadd.f32 0.0, %v262
    %v264 = vpop.f32.mrb[0].mxu0
    %265 = vdwg.mxu0
    %v266 = vadd.f32 %v173, %v258
    %v267 = vadd.f32 %v174, %v263
    %268 = vst.msk [vmem:[#allocation2] sm:$0xff] %vm73, %v266
    %269 = vst.msk [vmem:[#allocation2 + $0x8] sm:$0xff] %vm73, %v267
    // Predicated region
    $region30: #{tpu_custom_call.1} parent=1 // pred_check
      %p270 = pneg %p56
    $region31: #{tpu_custom_call.1} parent=1 // pred_check_branch
      %272 = sbr.rel (%p270) target = $region33
    $region32: #{tpu_custom_call.1} parent=1 // pred_region
      %v273 = vld [vmem:[#allocation2] sm:$0xff]
      %v274 = vld [vmem:[#allocation2 + $0x8] sm:$0xff]
      %275 = vst.msk [vmem:[#allocation9] sm:$0xff] %vm73, %v273
      %276 = vst.msk [vmem:[#allocation9 + $0x8] sm:$0xff] %vm73, %v274
    $region33: #{tpu_custom_call.1} parent=1 // pred_fallthru
      _
    // Predicated region
    $region34: #{tpu_custom_call.1} parent=1 // pred_check
      _
    $region35: #{tpu_custom_call.1} parent=1 // pred_check_branch
      %278 = sbr.rel (0) target = $region37
    $region36: #{tpu_custom_call.1} parent=1 // pred_region
      %s280 = ssub.s32 256, 256
      %281 = vsyncadd [#allocation5], %s280
      %s282 = sshll.u32 [#allocation9], 4
      %s283 = int_to_ptr.vmem [resolvable:$true] %s282
      %288 = dma.vmem_to_hbm [thread:$0]  %s283, 256, %s3, [#allocation5], 128, 128, 8
    $region37: #{tpu_custom_call.1} parent=1 // pred_fallthru
      _
    // Predicated region
    $region38: #{tpu_custom_call.1} parent=1 // pred_check
      _
    $region39: #{tpu_custom_call.1} parent=1 // pred_check_branch
      %290 = sbr.rel (0) target = $region41
    $region40: #{tpu_custom_call.1} parent=1 // pred_region
      %291 = dma.done [#allocation5], 256
    $region41: #{tpu_custom_call.1} parent=1 // pred_fallthru
      _
    %292 = vsyncpa [#allocation4], 1
    %293 = vsyncpa [#allocation7], 1
    %294 = vsyncpa [#allocation5], 1

</llo_original>
